<compile_context>
chip_gen: v7x
topology: tpu7x:2x2x1
jax: 0.10.0
libtpu: 0.0.40
codegen_flags: <defaults>
</compile_context>

<pallas_src>
import functools

import jax
import jax.numpy as jnp
import numpy as np
from jax.experimental import pallas as pl
from jax.experimental.pallas import tpu as pltpu


def _bilinear_interp_matrix(in_size: int, out_size: int) -> jnp.ndarray:
    """(out_size, in_size) matrix for 1D bilinear resize, align_corners=True."""
    if in_size == 1:
        return jnp.ones((out_size, 1), jnp.float32)
    coords = np.arange(out_size, dtype=np.float64) * (in_size - 1) / (out_size - 1)
    lo = np.clip(np.floor(coords).astype(np.int64), 0, in_size - 1)
    hi = np.minimum(lo + 1, in_size - 1)
    frac = coords - lo
    m = np.zeros((out_size, in_size), dtype=np.float64)
    rows = np.arange(out_size)
    np.add.at(m, (rows, lo), 1.0 - frac)
    np.add.at(m, (rows, hi), frac)
    return jnp.asarray(m, jnp.float32)


def _pick_row_tile(oh: int, out_dtype) -> int:
    """Largest clean row tile; prefer sublane-pack-friendly sizes per dtype."""
    bits = np.dtype(out_dtype).itemsize * 8
    min_sub = {32: 8, 16: 16, 8: 32}.get(bits, 8)
    for cand in (256, 128, 64, 32, 16, 8):
        if cand < oh and oh % cand == 0 and cand % min_sub == 0:
            return cand
    return oh


def _vmem_limit_bytes() -> int:
    """Scoped-VMEM limit with headroom for Mosaic's internal scratch."""
    default = 48 * 1024 * 1024
    try:  # best-effort hardware query only; never affects correctness
        cap = int(pltpu.get_tpu_info().vmem_capacity_bytes)
    except Exception:
        return default
    # ~85% of physical: ~108 MiB on v5e/v6e (128 MiB), ~54 MiB on v7x (64 MiB).
    return max(32 * 1024 * 1024, int(cap * 0.85))


def _up_guide_kernel(x_ref, wc_ref, wh_ref, wwT_ref, o_ref, t_ref, *,
                     C, H, OW, pack_channels):
    # x_ref:   (1, C*H, W)  full image of one batch (resident across row tiles)
    # wc_ref:  (C*C,)       1x1 conv weights in SMEM, row-major (out, in), f32
    # wh_ref:  (boh, H)     row-interp weights for this output-row tile
    # wwT_ref: (W, 2W)      pre-transposed column-interp weights (grid-invariant)
    # o_ref:   (1, C, boh, 2W)
    # t_ref:   (H, C*2W) if pack_channels else (C*H, 2W)  -- interp dtype (bf16)
    r = pl.program_id(1)
    idt = t_ref.dtype

    # Phase 0 (once per batch): channel mix (VPU, f32, SMEM scalars) fused with
    # the column interpolation (MXU, bf16 in / f32 accumulate), written
    # straight into t -- no separate channel-mixed scratch.
    @pl.when(r == 0)
    def _():
        # TODO(synk): for C >= 16 replace the O(C^2) VPU sweep with a single
        # MXU matmul Wconv(C,C) @ X(C, H*W); the module default is ch=3.
        for cp in range(C):
            acc = wc_ref[cp * C] * x_ref[0, 0:H, :]
            for c in range(1, C):
                acc = acc + wc_ref[cp * C + c] * x_ref[0, c * H:(c + 1) * H, :]
            col = jnp.dot(acc.astype(idt), wwT_ref[...],
                          preferred_element_type=jnp.float32).astype(idt)
            if pack_channels:
                t_ref[:, cp * OW:(cp + 1) * OW] = col
            else:
                t_ref[cp * H:(cp + 1) * H, :] = col

    # Row interpolation for this output-row tile.
    wh = wh_ref[...]
    if pack_channels:
        # One wide MXU matmul across all channels (fills the 256-wide MXU even
        # when 2W is small), then per-channel lane-slice stores into NCHW.
        y = jnp.dot(wh, t_ref[...], preferred_element_type=jnp.float32)
        for cp in range(C):
            o_ref[0, cp] = y[:, cp * OW:(cp + 1) * OW].astype(o_ref.dtype)
    else:
        # 2W already >= MXU width: per-channel matmuls, direct NCHW stores.
        for cp in range(C):
            y = jnp.dot(wh, t_ref[cp * H:(cp + 1) * H, :],
                        preferred_element_type=jnp.float32)
            o_ref[0, cp] = y.astype(o_ref.dtype)


def up_guide_forward(x: jnp.ndarray, conv_w: jnp.ndarray, *,
                     row_tile: int | None = None,
                     interp_dtype=jnp.bfloat16) -> jnp.ndarray:
    """x: (N, C, H, W); conv_w: (C, C, 1, 1)  ->  (N, C, 2H, 2W)."""
    n, c, h, w = x.shape
    oh, ow = 2 * h, 2 * w
    assert conv_w.shape == (c, c, 1, 1), conv_w.shape

    wh = _bilinear_interp_matrix(h, oh).astype(interp_dtype)       # (2H, H)
    wwT = _bilinear_interp_matrix(w, ow).T.astype(interp_dtype)    # (W, 2W)
    wc = conv_w.reshape(c * c).astype(jnp.float32)                 # SMEM scalars
    x3 = x.reshape(n, c * h, w)                                    # free HBM reshape

    boh = row_tile if row_tile is not None else _pick_row_tile(oh, x.dtype)
    assert oh % boh == 0 and (boh % 8 == 0 or boh == oh), (oh, boh)

    # Channel-interleaved t when per-channel 2W would underfill the MXU.
    pack_channels = (ow < 256) and (c * ow <= 4096)
    t_shape = (h, c * ow) if pack_channels else (c * h, ow)

    kernel = functools.partial(_up_guide_kernel, C=c, H=h, OW=ow,
                               pack_channels=pack_channels)

    fn = pl.pallas_call(
        kernel,
        out_shape=jax.ShapeDtypeStruct((n, c, oh, ow), x.dtype),
        grid_spec=pltpu.PrefetchScalarGridSpec(
            num_scalar_prefetch=0,
            grid=(n, oh // boh),
            in_specs=[
                # full (C*H, W) image of batch b; index is constant across r,
                # so Pallas does not re-DMA it per row tile.
                pl.BlockSpec((1, c * h, w), lambda b, r: (b, 0, 0)),
                # 1x1 conv weights as SMEM scalars (VPU channel mix).
                pl.BlockSpec(memory_space=pltpu.MemorySpace.SMEM),
                # row-interp weights: one (boh, H) row block per tile.
                pl.BlockSpec((boh, h), lambda b, r: (r, 0)),
                # col-interp weights: grid-invariant.
                pl.BlockSpec((w, ow), lambda b, r: (0, 0)),
            ],
            out_specs=pl.BlockSpec((1, c, boh, ow),
                                   lambda b, r: (b, 0, r, 0)),
            scratch_shapes=[pltpu.VMEM(t_shape, interp_dtype)],
        ),
        compiler_params=pltpu.CompilerParams(
            # NOTE: the row axis MUST stay "arbitrary": t is written only at
            # r == 0 and read by every later row tile of the same batch.
            dimension_semantics=("parallel", "arbitrary"),
            vmem_limit_bytes=_vmem_limit_bytes(),
        ),
    )
    return fn(x3, wc, wh, wwT)


def _reference(x, conv_w):
    """Pure-JAX reference (conv-before-upsample, mathematically identical)."""
    n, c, h, w = x.shape
    wh = _bilinear_interp_matrix(h, 2 * h)
    ww = _bilinear_interp_matrix(w, 2 * w)
    wconv = conv_w.reshape(c, c)
    xm = jnp.einsum("oc,nchw->nohw", wconv, x)
    t = jnp.einsum("ph,nchw->ncpw", wh, xm)
    return jnp.einsum("qw,ncpw->ncpq", ww, t)


if __name__ == "__main__":
    key = jax.random.PRNGKey(0)
    k_x, k_w = jax.random.split(key)

    N, C, H, W = 2, 4, 16, 16
    x = jax.random.normal(k_x, (N, C, H, W), dtype=jnp.float32)
    # Conv2d(ch, ch, 1, bias=False) weight: (C, C, 1, 1)
    conv_w = (jax.random.normal(k_w, (C, C, 1, 1), dtype=jnp.float32)
              * (1.0 / np.sqrt(C)))

    ref = _reference(x, conv_w)

    # f32 interpolation path: tight tolerance against the reference.
    out_f32 = jax.block_until_ready(
        up_guide_forward(x, conv_w, interp_dtype=jnp.float32))
    assert out_f32.shape == (N, C, 2 * H, 2 * W), out_f32.shape
    err_f32 = float(jnp.max(jnp.abs(out_f32 - ref)))
    assert jnp.allclose(out_f32, ref, atol=1e-5, rtol=1e-5), (
        "f32 mismatch vs reference, max abs err = %.3e" % err_f32)

    # Default path: bf16 MXU stages with f32 accumulation (dtype-aware tol).
    out_bf16 = jax.block_until_ready(up_guide_forward(x, conv_w))
    assert out_bf16.shape == (N, C, 2 * H, 2 * W), out_bf16.shape
    err_bf16 = float(jnp.max(jnp.abs(out_bf16 - ref)))
    assert jnp.allclose(out_bf16, ref, atol=8e-2, rtol=8e-2), (
        "bf16 mismatch vs reference, max abs err = %.3e" % err_bf16)

    print("KERNEL_OK")
</pallas_src>

<mosaic_0001>
module attributes {stable_mosaic.version = 11 : i64} {
  func.func @_up_guide_kernel(%arg0: i32, %arg1: i32, %arg2: memref<1x64x16xf32, #tpu.memory_space<vmem>>, %arg3: memref<16xf32, #tpu.memory_space<smem>>, %arg4: memref<16x16xf32, #tpu.memory_space<vmem>>, %arg5: memref<16x32xf32, #tpu.memory_space<vmem>>, %arg6: memref<1x4x16x32xf32, #tpu.memory_space<vmem>>, %arg7: memref<16x128xf32, #tpu.memory_space<vmem>>) attributes {dimension_semantics = [#tpu.dimension_semantics<parallel>, #tpu.dimension_semantics<arbitrary>], iteration_bounds = array<i64: 2, 2>, scalar_prefetch = 0 : i64, scratch_operands = 1 : i64, tpu.core_type = #tpu.core_type<tc>, window_params = [{transform_indices = @transform_0, window_bounds = array<i64: 1, 64, 16>}, {transform_indices = @transform_1, window_bounds = array<i64: 16>}, {transform_indices = @transform_2, window_bounds = array<i64: 16, 16>}, {pipeline_mode = #tpu.pipeline_mode<synchronous>, transform_indices = @transform_3, window_bounds = array<i64: 16, 32>}, {transform_indices = @transform_4, window_bounds = array<i64: 1, 4, 16, 32>}]} {
    %c0_i32 = arith.constant 0 : i32
    %0 = arith.cmpi eq, %arg1, %c0_i32 : i32
    %1 = arith.extui %0 : i1 to i32
    %c0_i32_0 = arith.constant 0 : i32
    %2 = arith.cmpi ne, %1, %c0_i32_0 : i32
    scf.if %2 {
      %c0_17 = arith.constant 0 : index
      %22 = memref.load %arg3[%c0_17] : memref<16xf32, #tpu.memory_space<smem>>
      %c0_18 = arith.constant 0 : index
      %c0_19 = arith.constant 0 : index
      %c0_20 = arith.constant 0 : index
      %23 = vector.load %arg2[%c0_18, %c0_19, %c0_20] : memref<1x64x16xf32, #tpu.memory_space<vmem>>, vector<1x16x16xf32>
      %24 = vector.shape_cast %23 : vector<1x16x16xf32> to vector<16x16xf32>
      %25 = vector.broadcast %22 : f32 to vector<16x16xf32>
      %26 = arith.mulf %25, %24 : vector<16x16xf32>
      %c1_21 = arith.constant 1 : index
      %27 = memref.load %arg3[%c1_21] : memref<16xf32, #tpu.memory_space<smem>>
      %c0_22 = arith.constant 0 : index
      %c16 = arith.constant 16 : index
      %c0_23 = arith.constant 0 : index
      %28 = vector.load %arg2[%c0_22, %c16, %c0_23] : memref<1x64x16xf32, #tpu.memory_space<vmem>>, vector<1x16x16xf32>
      %29 = vector.shape_cast %28 : vector<1x16x16xf32> to vector<16x16xf32>
      %30 = vector.broadcast %27 : f32 to vector<16x16xf32>
      %31 = arith.mulf %30, %29 : vector<16x16xf32>
      %32 = arith.addf %26, %31 : vector<16x16xf32>
      %c2_24 = arith.constant 2 : index
      %33 = memref.load %arg3[%c2_24] : memref<16xf32, #tpu.memory_space<smem>>
      %c0_25 = arith.constant 0 : index
      %c32 = arith.constant 32 : index
      %c0_26 = arith.constant 0 : index
      %34 = vector.load %arg2[%c0_25, %c32, %c0_26] : memref<1x64x16xf32, #tpu.memory_space<vmem>>, vector<1x16x16xf32>
      %35 = vector.shape_cast %34 : vector<1x16x16xf32> to vector<16x16xf32>
      %36 = vector.broadcast %33 : f32 to vector<16x16xf32>
      %37 = arith.mulf %36, %35 : vector<16x16xf32>
      %38 = arith.addf %32, %37 : vector<16x16xf32>
      %c3_27 = arith.constant 3 : index
      %39 = memref.load %arg3[%c3_27] : memref<16xf32, #tpu.memory_space<smem>>
      %c0_28 = arith.constant 0 : index
      %c48 = arith.constant 48 : index
      %c0_29 = arith.constant 0 : index
      %40 = vector.load %arg2[%c0_28, %c48, %c0_29] : memref<1x64x16xf32, #tpu.memory_space<vmem>>, vector<1x16x16xf32>
      %41 = vector.shape_cast %40 : vector<1x16x16xf32> to vector<16x16xf32>
      %42 = vector.broadcast %39 : f32 to vector<16x16xf32>
      %43 = arith.mulf %42, %41 : vector<16x16xf32>
      %44 = arith.addf %38, %43 : vector<16x16xf32>
      %c0_30 = arith.constant 0 : index
      %c0_31 = arith.constant 0 : index
      %45 = vector.load %arg5[%c0_30, %c0_31] : memref<16x32xf32, #tpu.memory_space<vmem>>, vector<16x32xf32>
      %cst_32 = arith.constant dense<0.000000e+00> : vector<16x32xf32>
      %46 = tpu.matmul %44, %45, %cst_32 {dimension_numbers = #tpu.dot_dimension_numbers<[1], [0], [0], [1], [0, 0, 1, 1], [], []>} : vector<16x16xf32>, vector<16x32xf32>, vector<16x32xf32> -> vector<16x32xf32>
      %c0_33 = arith.constant 0 : index
      %c0_34 = arith.constant 0 : index
      %47 = vector.load %arg7[%c0_33, %c0_34] : memref<16x128xf32, #tpu.memory_space<vmem>>, vector<16x32xf32>
      tpu.vector_store %arg7[%c0_33, %c0_34], %46 {strides = array<i32>} : memref<16x128xf32, #tpu.memory_space<vmem>>, vector<16x32xf32>,
      %c4 = arith.constant 4 : index
      %48 = memref.load %arg3[%c4] : memref<16xf32, #tpu.memory_space<smem>>
      %c0_35 = arith.constant 0 : index
      %c0_36 = arith.constant 0 : index
      %c0_37 = arith.constant 0 : index
      %49 = vector.load %arg2[%c0_35, %c0_36, %c0_37] : memref<1x64x16xf32, #tpu.memory_space<vmem>>, vector<1x16x16xf32>
      %50 = vector.shape_cast %49 : vector<1x16x16xf32> to vector<16x16xf32>
      %51 = vector.broadcast %48 : f32 to vector<16x16xf32>
      %52 = arith.mulf %51, %50 : vector<16x16xf32>
      %c5 = arith.constant 5 : index
      %53 = memref.load %arg3[%c5] : memref<16xf32, #tpu.memory_space<smem>>
      %c0_38 = arith.constant 0 : index
      %c16_39 = arith.constant 16 : index
      %c0_40 = arith.constant 0 : index
      %54 = vector.load %arg2[%c0_38, %c16_39, %c0_40] : memref<1x64x16xf32, #tpu.memory_space<vmem>>, vector<1x16x16xf32>
      %55 = vector.shape_cast %54 : vector<1x16x16xf32> to vector<16x16xf32>
      %56 = vector.broadcast %53 : f32 to vector<16x16xf32>
      %57 = arith.mulf %56, %55 : vector<16x16xf32>
      %58 = arith.addf %52, %57 : vector<16x16xf32>
      %c6 = arith.constant 6 : index
      %59 = memref.load %arg3[%c6] : memref<16xf32, #tpu.memory_space<smem>>
      %c0_41 = arith.constant 0 : index
      %c32_42 = arith.constant 32 : index
      %c0_43 = arith.constant 0 : index
      %60 = vector.load %arg2[%c0_41, %c32_42, %c0_43] : memref<1x64x16xf32, #tpu.memory_space<vmem>>, vector<1x16x16xf32>
      %61 = vector.shape_cast %60 : vector<1x16x16xf32> to vector<16x16xf32>
      %62 = vector.broadcast %59 : f32 to vector<16x16xf32>
      %63 = arith.mulf %62, %61 : vector<16x16xf32>
      %64 = arith.addf %58, %63 : vector<16x16xf32>
      %c7 = arith.constant 7 : index
      %65 = memref.load %arg3[%c7] : memref<16xf32, #tpu.memory_space<smem>>
      %c0_44 = arith.constant 0 : index
      %c48_45 = arith.constant 48 : index
      %c0_46 = arith.constant 0 : index
      %66 = vector.load %arg2[%c0_44, %c48_45, %c0_46] : memref<1x64x16xf32, #tpu.memory_space<vmem>>, vector<1x16x16xf32>
      %67 = vector.shape_cast %66 : vector<1x16x16xf32> to vector<16x16xf32>
      %68 = vector.broadcast %65 : f32 to vector<16x16xf32>
      %69 = arith.mulf %68, %67 : vector<16x16xf32>
      %70 = arith.addf %64, %69 : vector<16x16xf32>
      %c0_47 = arith.constant 0 : index
      %c0_48 = arith.constant 0 : index
      %71 = vector.load %arg5[%c0_47, %c0_48] : memref<16x32xf32, #tpu.memory_space<vmem>>, vector<16x32xf32>
      %cst_49 = arith.constant dense<0.000000e+00> : vector<16x32xf32>
      %72 = tpu.matmul %70, %71, %cst_49 {dimension_numbers = #tpu.dot_dimension_numbers<[1], [0], [0], [1], [0, 0, 1, 1], [], []>} : vector<16x16xf32>, vector<16x32xf32>, vector<16x32xf32> -> vector<16x32xf32>
      %c0_50 = arith.constant 0 : index
      %c32_51 = arith.constant 32 : index
      %73 = vector.load %arg7[%c0_50, %c32_51] : memref<16x128xf32, #tpu.memory_space<vmem>>, vector<16x32xf32>
      tpu.vector_store %arg7[%c0_50, %c32_51], %72 {strides = array<i32>} : memref<16x128xf32, #tpu.memory_space<vmem>>, vector<16x32xf32>,
      %c8 = arith.constant 8 : index
      %74 = memref.load %arg3[%c8] : memref<16xf32, #tpu.memory_space<smem>>
      %c0_52 = arith.constant 0 : index
      %c0_53 = arith.constant 0 : index
      %c0_54 = arith.constant 0 : index
      %75 = vector.load %arg2[%c0_52, %c0_53, %c0_54] : memref<1x64x16xf32, #tpu.memory_space<vmem>>, vector<1x16x16xf32>
      %76 = vector.shape_cast %75 : vector<1x16x16xf32> to vector<16x16xf32>
      %77 = vector.broadcast %74 : f32 to vector<16x16xf32>
      %78 = arith.mulf %77, %76 : vector<16x16xf32>
      %c9 = arith.constant 9 : index
      %79 = memref.load %arg3[%c9] : memref<16xf32, #tpu.memory_space<smem>>
      %c0_55 = arith.constant 0 : index
      %c16_56 = arith.constant 16 : index
      %c0_57 = arith.constant 0 : index
      %80 = vector.load %arg2[%c0_55, %c16_56, %c0_57] : memref<1x64x16xf32, #tpu.memory_space<vmem>>, vector<1x16x16xf32>
      %81 = vector.shape_cast %80 : vector<1x16x16xf32> to vector<16x16xf32>
      %82 = vector.broadcast %79 : f32 to vector<16x16xf32>
      %83 = arith.mulf %82, %81 : vector<16x16xf32>
      %84 = arith.addf %78, %83 : vector<16x16xf32>
      %c10 = arith.constant 10 : index
      %85 = memref.load %arg3[%c10] : memref<16xf32, #tpu.memory_space<smem>>
      %c0_58 = arith.constant 0 : index
      %c32_59 = arith.constant 32 : index
      %c0_60 = arith.constant 0 : index
      %86 = vector.load %arg2[%c0_58, %c32_59, %c0_60] : memref<1x64x16xf32, #tpu.memory_space<vmem>>, vector<1x16x16xf32>
      %87 = vector.shape_cast %86 : vector<1x16x16xf32> to vector<16x16xf32>
      %88 = vector.broadcast %85 : f32 to vector<16x16xf32>
      %89 = arith.mulf %88, %87 : vector<16x16xf32>
      %90 = arith.addf %84, %89 : vector<16x16xf32>
      %c11 = arith.constant 11 : index
      %91 = memref.load %arg3[%c11] : memref<16xf32, #tpu.memory_space<smem>>
      %c0_61 = arith.constant 0 : index
      %c48_62 = arith.constant 48 : index
      %c0_63 = arith.constant 0 : index
      %92 = vector.load %arg2[%c0_61, %c48_62, %c0_63] : memref<1x64x16xf32, #tpu.memory_space<vmem>>, vector<1x16x16xf32>
      %93 = vector.shape_cast %92 : vector<1x16x16xf32> to vector<16x16xf32>
      %94 = vector.broadcast %91 : f32 to vector<16x16xf32>
      %95 = arith.mulf %94, %93 : vector<16x16xf32>
      %96 = arith.addf %90, %95 : vector<16x16xf32>
      %c0_64 = arith.constant 0 : index
      %c0_65 = arith.constant 0 : index
      %97 = vector.load %arg5[%c0_64, %c0_65] : memref<16x32xf32, #tpu.memory_space<vmem>>, vector<16x32xf32>
      %cst_66 = arith.constant dense<0.000000e+00> : vector<16x32xf32>
      %98 = tpu.matmul %96, %97, %cst_66 {dimension_numbers = #tpu.dot_dimension_numbers<[1], [0], [0], [1], [0, 0, 1, 1], [], []>} : vector<16x16xf32>, vector<16x32xf32>, vector<16x32xf32> -> vector<16x32xf32>
      %c0_67 = arith.constant 0 : index
      %c64 = arith.constant 64 : index
      %99 = vector.load %arg7[%c0_67, %c64] : memref<16x128xf32, #tpu.memory_space<vmem>>, vector<16x32xf32>
      tpu.vector_store %arg7[%c0_67, %c64], %98 {strides = array<i32>} : memref<16x128xf32, #tpu.memory_space<vmem>>, vector<16x32xf32>,
      %c12 = arith.constant 12 : index
      %100 = memref.load %arg3[%c12] : memref<16xf32, #tpu.memory_space<smem>>
      %c0_68 = arith.constant 0 : index
      %c0_69 = arith.constant 0 : index
      %c0_70 = arith.constant 0 : index
      %101 = vector.load %arg2[%c0_68, %c0_69, %c0_70] : memref<1x64x16xf32, #tpu.memory_space<vmem>>, vector<1x16x16xf32>
      %102 = vector.shape_cast %101 : vector<1x16x16xf32> to vector<16x16xf32>
      %103 = vector.broadcast %100 : f32 to vector<16x16xf32>
      %104 = arith.mulf %103, %102 : vector<16x16xf32>
      %c13 = arith.constant 13 : index
      %105 = memref.load %arg3[%c13] : memref<16xf32, #tpu.memory_space<smem>>
      %c0_71 = arith.constant 0 : index
      %c16_72 = arith.constant 16 : index
      %c0_73 = arith.constant 0 : index
      %106 = vector.load %arg2[%c0_71, %c16_72, %c0_73] : memref<1x64x16xf32, #tpu.memory_space<vmem>>, vector<1x16x16xf32>
      %107 = vector.shape_cast %106 : vector<1x16x16xf32> to vector<16x16xf32>
      %108 = vector.broadcast %105 : f32 to vector<16x16xf32>
      %109 = arith.mulf %108, %107 : vector<16x16xf32>
      %110 = arith.addf %104, %109 : vector<16x16xf32>
      %c14 = arith.constant 14 : index
      %111 = memref.load %arg3[%c14] : memref<16xf32, #tpu.memory_space<smem>>
      %c0_74 = arith.constant 0 : index
      %c32_75 = arith.constant 32 : index
      %c0_76 = arith.constant 0 : index
      %112 = vector.load %arg2[%c0_74, %c32_75, %c0_76] : memref<1x64x16xf32, #tpu.memory_space<vmem>>, vector<1x16x16xf32>
      %113 = vector.shape_cast %112 : vector<1x16x16xf32> to vector<16x16xf32>
      %114 = vector.broadcast %111 : f32 to vector<16x16xf32>
      %115 = arith.mulf %114, %113 : vector<16x16xf32>
      %116 = arith.addf %110, %115 : vector<16x16xf32>
      %c15 = arith.constant 15 : index
      %117 = memref.load %arg3[%c15] : memref<16xf32, #tpu.memory_space<smem>>
      %c0_77 = arith.constant 0 : index
      %c48_78 = arith.constant 48 : index
      %c0_79 = arith.constant 0 : index
      %118 = vector.load %arg2[%c0_77, %c48_78, %c0_79] : memref<1x64x16xf32, #tpu.memory_space<vmem>>, vector<1x16x16xf32>
      %119 = vector.shape_cast %118 : vector<1x16x16xf32> to vector<16x16xf32>
      %120 = vector.broadcast %117 : f32 to vector<16x16xf32>
      %121 = arith.mulf %120, %119 : vector<16x16xf32>
      %122 = arith.addf %116, %121 : vector<16x16xf32>
      %c0_80 = arith.constant 0 : index
      %c0_81 = arith.constant 0 : index
      %123 = vector.load %arg5[%c0_80, %c0_81] : memref<16x32xf32, #tpu.memory_space<vmem>>, vector<16x32xf32>
      %cst_82 = arith.constant dense<0.000000e+00> : vector<16x32xf32>
      %124 = tpu.matmul %122, %123, %cst_82 {dimension_numbers = #tpu.dot_dimension_numbers<[1], [0], [0], [1], [0, 0, 1, 1], [], []>} : vector<16x16xf32>, vector<16x32xf32>, vector<16x32xf32> -> vector<16x32xf32>
      %c0_83 = arith.constant 0 : index
      %c96 = arith.constant 96 : index
      %125 = vector.load %arg7[%c0_83, %c96] : memref<16x128xf32, #tpu.memory_space<vmem>>, vector<16x32xf32>
      tpu.vector_store %arg7[%c0_83, %c96], %124 {strides = array<i32>} : memref<16x128xf32, #tpu.memory_space<vmem>>, vector<16x32xf32>,
    } else {
    }
    %c0 = arith.constant 0 : index
    %c0_1 = arith.constant 0 : index
    %3 = vector.load %arg4[%c0, %c0_1] : memref<16x16xf32, #tpu.memory_space<vmem>>, vector<16x16xf32>
    %c0_2 = arith.constant 0 : index
    %c0_3 = arith.constant 0 : index
    %4 = vector.load %arg7[%c0_2, %c0_3] : memref<16x128xf32, #tpu.memory_space<vmem>>, vector<16x128xf32>
    %cst = arith.constant dense<0.000000e+00> : vector<16x128xf32>
    %5 = tpu.matmul %3, %4, %cst {dimension_numbers = #tpu.dot_dimension_numbers<[1], [0], [0], [1], [0, 0, 1, 1], [], []>} : vector<16x16xf32>, vector<16x128xf32>, vector<16x128xf32> -> vector<16x128xf32>
    %6 = vector.extract_strided_slice %5 {offsets = [0, 0], sizes = [16, 32], strides = [1, 1]} : vector<16x128xf32> to vector<16x32xf32>
    %c0_4 = arith.constant 0 : index
    %c0_5 = arith.constant 0 : index
    %c0_6 = arith.constant 0 : index
    %c0_7 = arith.constant 0 : index
    %7 = vector.load %arg6[%c0_4, %c0_5, %c0_6, %c0_7] : memref<1x4x16x32xf32, #tpu.memory_space<vmem>>, vector<1x1x16x32xf32>
    %8 = vector.shape_cast %7 : vector<1x1x16x32xf32> to vector<16x32xf32>
    %9 = vector.shape_cast %6 : vector<16x32xf32> to vector<1x1x16x32xf32>
    tpu.vector_store %arg6[%c0_4, %c0_5, %c0_6, %c0_7], %9 {strides = array<i32>} : memref<1x4x16x32xf32, #tpu.memory_space<vmem>>, vector<1x1x16x32xf32>,
    %10 = vector.extract_strided_slice %5 {offsets = [0, 32], sizes = [16, 32], strides = [1, 1]} : vector<16x128xf32> to vector<16x32xf32>
    %c0_8 = arith.constant 0 : index
    %c1 = arith.constant 1 : index
    %c0_9 = arith.constant 0 : index
    %c0_10 = arith.constant 0 : index
    %11 = vector.load %arg6[%c0_8, %c1, %c0_9, %c0_10] : memref<1x4x16x32xf32, #tpu.memory_space<vmem>>, vector<1x1x16x32xf32>
    %12 = vector.shape_cast %11 : vector<1x1x16x32xf32> to vector<16x32xf32>
    %13 = vector.shape_cast %10 : vector<16x32xf32> to vector<1x1x16x32xf32>
    tpu.vector_store %arg6[%c0_8, %c1, %c0_9, %c0_10], %13 {strides = array<i32>} : memref<1x4x16x32xf32, #tpu.memory_space<vmem>>, vector<1x1x16x32xf32>,
    %14 = vector.extract_strided_slice %5 {offsets = [0, 64], sizes = [16, 32], strides = [1, 1]} : vector<16x128xf32> to vector<16x32xf32>
    %c0_11 = arith.constant 0 : index
    %c2 = arith.constant 2 : index
    %c0_12 = arith.constant 0 : index
    %c0_13 = arith.constant 0 : index
    %15 = vector.load %arg6[%c0_11, %c2, %c0_12, %c0_13] : memref<1x4x16x32xf32, #tpu.memory_space<vmem>>, vector<1x1x16x32xf32>
    %16 = vector.shape_cast %15 : vector<1x1x16x32xf32> to vector<16x32xf32>
    %17 = vector.shape_cast %14 : vector<16x32xf32> to vector<1x1x16x32xf32>
    tpu.vector_store %arg6[%c0_11, %c2, %c0_12, %c0_13], %17 {strides = array<i32>} : memref<1x4x16x32xf32, #tpu.memory_space<vmem>>, vector<1x1x16x32xf32>,
    %18 = vector.extract_strided_slice %5 {offsets = [0, 96], sizes = [16, 32], strides = [1, 1]} : vector<16x128xf32> to vector<16x32xf32>
    %c0_14 = arith.constant 0 : index
    %c3 = arith.constant 3 : index
    %c0_15 = arith.constant 0 : index
    %c0_16 = arith.constant 0 : index
    %19 = vector.load %arg6[%c0_14, %c3, %c0_15, %c0_16] : memref<1x4x16x32xf32, #tpu.memory_space<vmem>>, vector<1x1x16x32xf32>
    %20 = vector.shape_cast %19 : vector<1x1x16x32xf32> to vector<16x32xf32>
    %21 = vector.shape_cast %18 : vector<16x32xf32> to vector<1x1x16x32xf32>
    tpu.vector_store %arg6[%c0_14, %c3, %c0_15, %c0_16], %21 {strides = array<i32>} : memref<1x4x16x32xf32, #tpu.memory_space<vmem>>, vector<1x1x16x32xf32>,
    return
  }
  func.func @transform_0(%arg0: i32, %arg1: i32) -> (i32, i32, i32) {
    %c0_i32 = arith.constant 0 : i32
    %c0_i32_0 = arith.constant 0 : i32
    %c0_i32_1 = arith.constant 0 : i32
    return %arg0, %c0_i32, %c0_i32_0 : i32, i32, i32
  }
  func.func @transform_1(%arg0: i32, %arg1: i32) -> i32 {
    %c0_i32 = arith.constant 0 : i32
    %c0_i32_0 = arith.constant 0 : i32
    return %c0_i32 : i32
  }
  func.func @transform_2(%arg0: i32, %arg1: i32) -> (i32, i32) {
    %c0_i32 = arith.constant 0 : i32
    %c0_i32_0 = arith.constant 0 : i32
    return %arg1, %c0_i32 : i32, i32
  }
  func.func @transform_3(%arg0: i32, %arg1: i32) -> (i32, i32) {
    %c0_i32 = arith.constant 0 : i32
    %c0_i32_0 = arith.constant 0 : i32
    %c0_i32_1 = arith.constant 0 : i32
    return %c0_i32, %c0_i32_0 : i32, i32
  }
  func.func @transform_4(%arg0: i32, %arg1: i32) -> (i32, i32, i32, i32) {
    %c0_i32 = arith.constant 0 : i32
    %c0_i32_0 = arith.constant 0 : i32
    %c0_i32_1 = arith.constant 0 : i32
    return %arg0, %c0_i32, %arg1, %c0_i32_0 : i32, i32, i32, i32
  }
}

</mosaic_0001>

<llo_original>
// kernel: tpu_custom_call.1
$region0: #{tpu_custom_call.1}
  #allocation0 [shape = 'u32[]', space=smem, size = 0x4, offset = 0x4, fixed_abs, tag = 'smem constant byte address 0x4 - core index']
  #allocation1 [shape = 'u32[144,128]{1,0:T(1,128)}', space=vmem, size = 0x12000, scoped, tag = 'internal scratch']
  #allocation2 [shape = 'f32[16,128]{1,0:T(8,128)}', space=vmem, size = 0x2000, scoped, tag = 'scratch operand']
  #allocation7 [shape = 's32[]', space=sflag, size = 0x4, offset = 0, fixed_abs, tag = 'sflag constant byte address 0x0 - dummy sync flag']
  %s0 = inlined_call_operand.vmem [shape: f32[2,64,16], index: 0, kind: input, shape index: {}]
  %s1 = inlined_call_operand.vmem [shape: f32[16], index: 1, kind: input, shape index: {}]
  %s2 = inlined_call_operand.vmem [shape: f32[32,16], index: 2, kind: input, shape index: {}]
  %s3 = inlined_call_operand.vmem [shape: f32[16,32], index: 3, kind: input, shape index: {}]
  %s4 = inlined_call_operand.hbm [shape: f32[2,4,32,32], index: 4, kind: output, shape index: {}]
  %s5 = sld [smem:[#allocation0]]
  $region57: #{tpu_custom_call.1} parent=0
    _
  %s7 = ssub.s32 1, %s5
  %s8 = scalar_select 0, %s7, %s5
  $region1: #{tpu_custom_call.1} parent=0
    #allocation3 [shape = 'u8[512]{0}', space=smem, size = 0x200, scoped, tag = 'input window, operand 1, single buffered']
    #allocation4 [shape = 's32[2]{0}', space=sflag, size = 0x8, scoped, tag = 'scoped memory for tpu_custom_call.1']
    #allocation5 [shape = 's32[2]{0}', space=sflag, size = 0x8, scoped, tag = 'scoped memory for tpu_custom_call.1']
    #allocation6 [shape = 'u8[65536]{0}', space=vmem, size = 0x10000, scoped, tag = 'output window, operand 0']
    %9 = vsyncpa [#allocation5], 0
    %10 = vsyncpa [#allocation4], 0
    %s11 = scalar_lea.sflag [#allocation4], 1
    %12 = vsyncpa %s11, 0
    loop: start=0, step=1, limit=6
    $region2: #{tpu_custom_call.1} parent=1 // loop_pre_header
      _
    $region3: #{tpu_custom_call.1} parent=1 // loop_header
      %s14 = sphi 0, %s18
      %p15 = scmp.ge.s32.totalorder %s14, 6
      %s21 = sphi 0, %s33
      %s22 = sphi 0, %s29
      %s23 = sphi 0, %s21
      %s24 = sphi 0, %s22
      %s25 = sphi 0, %s23
      %s26 = sphi 0, %s24
      %s36 = sphi 0, %s38
      %s39 = sphi 0, %s36
      %s40 = sphi 0, %s39
      %s56 = sphi 0, %s40
      %s60 = sphi 0, %s60
      %s62 = sphi 0, %s60
      %s63 = sphi 0, %s62
      %s77 = sphi 0, %s63
      %s83 = sphi 0, %s85
      %s86 = sphi 0, %s83
      %s87 = sphi 0, %s86
      %s103 = sphi 0, %s87
      %s107 = sphi 0, %s107
      %s109 = sphi 0, %s107
      %s110 = sphi 0, %s109
      %s124 = sphi 0, %s110
      %s132 = sphi 0, %s134
      %s135 = sphi 0, %s132
      %s136 = sphi 0, %s135
      %s152 = sphi 0, %s136
    $region4: #{tpu_custom_call.1} parent=1 // loop_header_branch
      %17 = sbr.rel (%p15) target = $region8
    $region5: #{tpu_custom_call.1} parent=1 // loop_body
      %s19 = ssub.s32 %s14, 1
      %s20 = ssub.s32 %s14, 2
      %s27 = sadd.s32 1, %s22
      %p28 = scmp.ge.s32.totalorder %s27, 2
      %s29 = scalar_select %p28, 0, %s27
      %s30 = sadd.s32 1, %s21
      %s31 = scalar_select %p28, %s30, %s21
      %p32 = scmp.ge.s32.totalorder %s31, 2
      %s33 = scalar_select %p32, 0, %s31
      %s34 = ssub.s32 %s21, %s33
      %p35 = scmp.eq.s32.totalorder %s34, 0
      %s37 = sadd.s32 %s36, 1
      %s38 = scalar_select %p35, %s36, %s37
      %p41 = pneg %p35
      %p42 = scmp.eq.s32.totalorder %s14, 3
      %p43 = por %p41, %p42
      %p44 = scmp.ne.s32.totalorder %s36, %s39
      %p45 = scmp.eq.s32.totalorder %s14, 0
      %p46 = por %p44, %p45
      %p47 = scmp.ne.s32.totalorder %s36, %s39
      %p48 = scmp.eq.s32.totalorder %s19, 3
      %p49 = por %p47, %p48
      %p50 = scmp.ne.s32.totalorder %s39, %s40
      %p51 = scmp.eq.s32.totalorder %s19, 0
      %p52 = por %p50, %p51
      %p53 = scmp.ne.s32.totalorder %s39, %s40
      %p54 = scmp.eq.s32.totalorder %s20, 3
      %p55 = por %p53, %p54
      %p57 = scmp.ne.s32.totalorder %s40, %s56
      %p58 = scmp.eq.s32.totalorder %s20, 0
      %p59 = por %p57, %p58
      %s61 = sadd.s32 %s60, 1
      %p64 = scmp.eq.s32.totalorder %s14, 3
      %p65 = scmp.ne.s32.totalorder %s60, %s62
      %p66 = scmp.eq.s32.totalorder %s14, 0
      %p67 = por %p65, %p66
      %p68 = scmp.ne.s32.totalorder %s60, %s62
      %p69 = scmp.eq.s32.totalorder %s19, 3
      %p70 = por %p68, %p69
      %p71 = scmp.ne.s32.totalorder %s62, %s63
      %p72 = scmp.eq.s32.totalorder %s19, 0
      %p73 = por %p71, %p72
      %p74 = scmp.ne.s32.totalorder %s62, %s63
      %p75 = scmp.eq.s32.totalorder %s20, 3
      %p76 = por %p74, %p75
      %p78 = scmp.ne.s32.totalorder %s63, %s77
      %p79 = scmp.eq.s32.totalorder %s20, 0
      %p80 = por %p78, %p79
      %s81 = ssub.s32 %s22, %s29
      %p82 = scmp.eq.s32.totalorder %s81, 0
      %s84 = sadd.s32 %s83, 1
      %s85 = scalar_select %p82, %s83, %s84
      %p88 = pneg %p82
      %p89 = scmp.eq.s32.totalorder %s14, 3
      %p90 = por %p88, %p89
      %p91 = scmp.ne.s32.totalorder %s83, %s86
      %p92 = scmp.eq.s32.totalorder %s14, 0
      %p93 = por %p91, %p92
      %p94 = scmp.ne.s32.totalorder %s83, %s86
      %p95 = scmp.eq.s32.totalorder %s19, 3
      %p96 = por %p94, %p95
      %p97 = scmp.ne.s32.totalorder %s86, %s87
      %p98 = scmp.eq.s32.totalorder %s19, 0
      %p99 = por %p97, %p98
      %p100 = scmp.ne.s32.totalorder %s86, %s87
      %p101 = scmp.eq.s32.totalorder %s20, 3
      %p102 = por %p100, %p101
      %p104 = scmp.ne.s32.totalorder %s87, %s103
      %p105 = scmp.eq.s32.totalorder %s20, 0
      %p106 = por %p104, %p105
      %s108 = sadd.s32 %s107, 1
      %p111 = scmp.eq.s32.totalorder %s14, 3
      %p112 = scmp.ne.s32.totalorder %s107, %s109
      %p113 = scmp.eq.s32.totalorder %s14, 0
      %p114 = por %p112, %p113
      %p115 = scmp.ne.s32.totalorder %s107, %s109
      %p116 = scmp.eq.s32.totalorder %s19, 3
      %p117 = por %p115, %p116
      %p118 = scmp.ne.s32.totalorder %s109, %s110
      %p119 = scmp.eq.s32.totalorder %s19, 0
      %p120 = por %p118, %p119
      %p121 = scmp.ne.s32.totalorder %s109, %s110
      %p122 = scmp.eq.s32.totalorder %s20, 3
      %p123 = por %p121, %p122
      %p125 = scmp.ne.s32.totalorder %s110, %s124
      %p126 = scmp.eq.s32.totalorder %s20, 0
      %p127 = por %p125, %p126
      %s128 = ssub.s32 %s21, %s33
      %s129 = ssub.s32 %s22, %s29
      %s130 = sor.u32 %s128, %s129
      %p131 = scmp.eq.s32.totalorder %s130, 0
      %s133 = sadd.s32 %s132, 1
      %s134 = scalar_select %p131, %s132, %s133
      %p137 = pneg %p131
      %p138 = scmp.eq.s32.totalorder %s14, 3
      %p139 = por %p137, %p138
      %p140 = scmp.ne.s32.totalorder %s132, %s135
      %p141 = scmp.eq.s32.totalorder %s14, 0
      %p142 = por %p140, %p141
      %p143 = scmp.ne.s32.totalorder %s132, %s135
      %p144 = scmp.eq.s32.totalorder %s19, 3
      %p145 = por %p143, %p144
      %p146 = scmp.ne.s32.totalorder %s135, %s136
      %p147 = scmp.eq.s32.totalorder %s19, 0
      %p148 = por %p146, %p147
      %p149 = scmp.ne.s32.totalorder %s135, %s136
      %p150 = scmp.eq.s32.totalorder %s20, 3
      %p151 = por %p149, %p150
      %p153 = scmp.ne.s32.totalorder %s136, %s152
      %p154 = scmp.eq.s32.totalorder %s20, 0
      %p155 = por %p153, %p154
      %p156 = scmp.le.s32.totalorder 1, %s14
      %p157 = scmp.lt.s32.totalorder %s14, 5
      %p158 = pnand %p156, %p157
      %p159 = pneg %p158
      // Predicated region
      $region9: #{tpu_custom_call.1} parent=5 // pred_check
        _
      $region10: #{tpu_custom_call.1} parent=5 // pred_check_branch
        %161 = sbr.rel (%p158) target = $region12
      $region11: #{tpu_custom_call.1} parent=5 // pred_region
        %s162 = ssub.s32 %s14, 1
        // Predicated region
        $region13: #{tpu_custom_call.1} parent=11 // pred_check
          %p163 = pneg %p73
        $region14: #{tpu_custom_call.1} parent=11 // pred_check_branch
          %165 = sbr.rel (%p163) target = $region16
        $region15: #{tpu_custom_call.1} parent=11 // pred_region
          %s167 = ssub.s32 16, 16
          %168 = vsyncadd [#allocation5], %s167
          %s170 = sshll.u32 %s1, 4
          %s171 = int_to_ptr.vmem [resolvable:$true] %s170
          %173 = dma.vmem_to_smem %s171, 16, [#allocation3], [#allocation5]
        $region16: #{tpu_custom_call.1} parent=11 // pred_fallthru
          _
        // Predicated region
        $region17: #{tpu_custom_call.1} parent=11 // pred_check
          %p174 = pneg %p120
        $region18: #{tpu_custom_call.1} parent=11 // pred_check_branch
          %176 = sbr.rel (%p174) target = $region20
        $region19: #{tpu_custom_call.1} parent=11 // pred_region
          _
        $region20: #{tpu_custom_call.1} parent=11 // pred_fallthru
          _
      $region12: #{tpu_custom_call.1} parent=5 // pred_fallthru
        _
      %p177 = scmp.lt.s32.totalorder %s14, 4
      // Predicated region
      $region21: #{tpu_custom_call.1} parent=5 // pred_check
        %p178 = pneg %p177
      $region22: #{tpu_custom_call.1} parent=5 // pred_check_branch
        %180 = sbr.rel (%p178) target = $region24
      $region23: #{tpu_custom_call.1} parent=5 // pred_region
        // Predicated region
        $region25: #{tpu_custom_call.1} parent=23 // pred_check
          %p181 = pneg %p46
        $region26: #{tpu_custom_call.1} parent=23 // pred_check_branch
          %183 = sbr.rel (%p181) target = $region28
        $region27: #{tpu_custom_call.1} parent=23 // pred_region
          %p184 = scmp.lt.s32.totalorder %s21, 1
          %s185 = scalar_select %p184, %s21, 1
          %s186 = smul.addr %s185, 8
          %s187 = smul.addr %s186, 8
          %s188 = scalar_lea.vmem %s0, %s187
        $region28: #{tpu_custom_call.1} parent=23 // pred_fallthru
          _
        // Predicated region
        $region29: #{tpu_custom_call.1} parent=23 // pred_check
          %p189 = pneg %p93
        $region30: #{tpu_custom_call.1} parent=23 // pred_check_branch
          %191 = sbr.rel (%p189) target = $region32
        $region31: #{tpu_custom_call.1} parent=23 // pred_region
          %s192 = smul.u32 2, %s22
          %p193 = scmp.lt.s32.totalorder %s192, 3
          %s194 = scalar_select %p193, %s192, 3
          %s195 = smul.addr %s194, 8
          %s196 = scalar_lea.vmem %s2, %s195
          %s197 = smul.u32 2, %s22
        $region32: #{tpu_custom_call.1} parent=23 // pred_fallthru
          _
      $region24: #{tpu_custom_call.1} parent=5 // pred_fallthru
        _
      %p198 = scmp.le.s32.totalorder 1, %s14
      %p199 = scmp.lt.s32.totalorder %s14, 5
      %p200 = pnand %p198, %p199
      %p201 = pneg %p200
      // Predicated region
      $region33: #{tpu_custom_call.1} parent=5 // pred_check
        _
      $region34: #{tpu_custom_call.1} parent=5 // pred_check_branch
        %203 = sbr.rel (%p200) target = $region36
      $region35: #{tpu_custom_call.1} parent=5 // pred_region
        %s204 = ssub.s32 %s14, 1
        // Predicated region
        $region37: #{tpu_custom_call.1} parent=35 // pred_check
          %p205 = pneg %p73
        $region38: #{tpu_custom_call.1} parent=35 // pred_check_branch
          %207 = sbr.rel (%p205) target = $region40
        $region39: #{tpu_custom_call.1} parent=35 // pred_region
          %208 = dma.done [#allocation5], 16
        $region40: #{tpu_custom_call.1} parent=35 // pred_fallthru
          _
        %209 = sfence
        %p210 = scmp.lt.s32.totalorder %s23, 1
        %s211 = scalar_select %p210, %s23, 1
        %s212 = smul.addr %s211, 8
        %s213 = smul.addr %s212, 8
        %s214 = scalar_lea.vmem %s0, %s213
        %p215 = pneg %p52
        %p216 = pneg %p49
        %p217 = pneg %p73
        %p218 = pneg %p70
        %s219 = smul.u32 2, %s24
        %p220 = scmp.lt.s32.totalorder %s219, 3
        %s221 = scalar_select %p220, %s219, 3
        %s222 = smul.addr %s221, 8
        %s223 = scalar_lea.vmem %s2, %s222
        %p224 = pneg %p99
        %p225 = pneg %p96
        %p226 = pneg %p120
        %p227 = pneg %p117
        %p228 = pneg %p148
        %p229 = pneg %p145
        %s230 = sand.u32 %s135, 1
        %s231 = scalar_lea.sflag [#allocation4], %s230
        %s232 = sand.u32 %s135, 1
        %s233 = smul.addr %s232, 64
        %s234 = scalar_lea.vmem [#allocation6], %s233
        %p235 = scmp.lt.s32.totalorder %s23, 1
        %s236 = scalar_select %p235, %s23, 1
        %s237 = smul.addr %s236, 8
        %s238 = smul.addr %s237, 8
        %s239 = scalar_lea.vmem %s0, %s238
        %s240 = smul.u32 2, %s24
        %p241 = scmp.lt.s32.totalorder %s240, 3
        %s242 = scalar_select %p241, %s240, 3
        %s243 = smul.addr %s242, 8
        %s244 = scalar_lea.vmem %s2, %s243
        %s245 = smul.u32 2, %s24
        %s246 = smul.u32 2, %s24
        %p247 = scmp.eq.s32.totalorder %s24, 0
        // Predicated region
        $region41: #{tpu_custom_call.1} parent=35 // pred_check
          %p248 = pneg %p247
        $region42: #{tpu_custom_call.1} parent=35 // pred_check_branch
          %250 = sbr.rel (%p248) target = $region44
        $region43: #{tpu_custom_call.1} parent=35 // pred_region
          %s251 = sld [smem:[#allocation3]]
          %v252 = vld [vmem:[%s239] sm:$0xff]
          %v253 = vld [vmem:[%s239 + $0x8] sm:$0xff]
          %v254 = vstv %s251
          %v255 = vmul.f32 %v254, %v252
          %v256 = vmul.f32 %v254, %v253
          %s257 = sld [smem:[#allocation3 + $0x1]]
          %v258 = vld [vmem:[%s239 + $0x10] sm:$0xff]
          %v259 = vld [vmem:[%s239 + $0x18] sm:$0xff]
          %v260 = vstv %s257
          %v261 = vmul.f32 %v260, %v258
          %v262 = vmul.f32 %v260, %v259
          %v263 = vadd.f32 %v255, %v261
          %v264 = vadd.f32 %v256, %v262
          %s265 = sld [smem:[#allocation3 + $0x2]]
          %v266 = vld [vmem:[%s239 + $0x20] sm:$0xff]
          %v267 = vld [vmem:[%s239 + $0x28] sm:$0xff]
          %v268 = vstv %s265
          %v269 = vmul.f32 %v268, %v266
          %v270 = vmul.f32 %v268, %v267
          %v271 = vadd.f32 %v263, %v269
          %v272 = vadd.f32 %v264, %v270
          %s273 = sld [smem:[#allocation3 + $0x3]]
          %v274 = vld [vmem:[%s239 + $0x30] sm:$0xff]
          %v275 = vld [vmem:[%s239 + $0x38] sm:$0xff]
          %v276 = vstv %s273
          %v277 = vmul.f32 %v276, %v274
          %v278 = vmul.f32 %v276, %v275
          %v279 = vadd.f32 %v271, %v277
          %v280 = vadd.f32 %v272, %v278
          %v281 = vld [vmem:[%s3] sm:$0xff]
          %v282 = vld [vmem:[%s3 + $0x8] sm:$0xff]
          %vm283 = vcmask 130048
          %v285 = vsel %vm283, %v279, 0
          %v288 = vsel %vm283, %v280, 0
          %290 = vmatprep.subr.mxu0 0.0
          %291 = vmatpush1.msra.mxu0 %v281
          %292 = vmatprep.subr.mxu0 0.0
          %293 = vmatpush1.msra.mxu0 %v282
          %294 = vmatprep.subr.mxu0 0.0
          %295 = vmatpush1.msra.mxu0 0.0
          %296 = vmatprep.subr.mxu0 0.0
          %297 = vmatpush1.msra.mxu0 0.0
          %298 = vmatprep.subr.mxu0 0.0
          %299 = vmatpush1.msra.mxu0 0.0
          %300 = vmatprep.subr.mxu0 0.0
          %301 = vmatpush1.msra.mxu0 0.0
          %302 = vmatprep.subr.mxu0 0.0
          %303 = vmatpush1.msra.mxu0 0.0
          %304 = vmatprep.subr.mxu0 0.0
          %305 = vmatpush1.msra.mxu0 0.0
          %306 = vmatprep.subr.mxu0 0.0
          %307 = vmatpush1.msra.mxu0 0.0
          %308 = vmatprep.subr.mxu0 0.0
          %309 = vmatpush1.msra.mxu0 0.0
          %310 = vmatprep.subr.mxu0 0.0
          %311 = vmatpush1.msra.mxu0 0.0
          %312 = vmatprep.subr.mxu0 0.0
          %313 = vmatpush1.msra.mxu0 0.0
          %314 = vmatprep.subr.mxu0 0.0
          %315 = vmatpush1.msra.mxu0 0.0
          %316 = vmatprep.subr.mxu0 0.0
          %317 = vmatpush1.msra.mxu0 0.0
          %318 = vmatprep.subr.mxu0 0.0
          %319 = vmatpush1.msra.mxu0 0.0
          %320 = vmatprep.subr.mxu0 0.0
          %321 = vmatpush1.msra.mxu0 0.0
          %322 = vmatprep.subr.mxu0 0.0
          %323 = vmatpush1.msra.mxu0 0.0
          %324 = vmatprep.subr.mxu0 0.0
          %325 = vmatpush1.msra.mxu0 0.0
          %326 = vmatprep.subr.mxu0 0.0
          %327 = vmatpush1.msra.mxu0 0.0
          %328 = vmatprep.subr.mxu0 0.0
          %329 = vmatpush1.msra.mxu0 0.0
          %330 = vmatprep.subr.mxu0 0.0
          %331 = vmatpush1.msra.mxu0 0.0
          %332 = vmatprep.subr.mxu0 0.0
          %333 = vmatpush1.msra.mxu0 0.0
          %334 = vmatprep.subr.mxu0 0.0
          %335 = vmatpush1.msra.mxu0 0.0
          %336 = vmatprep.subr.mxu0 0.0
          %337 = vmatpush1.msra.mxu0 0.0
          %338 = vmatprep.subr.mxu0 0.0
          %339 = vmatpush1.msra.mxu0 0.0
          %340 = vmatprep.subr.mxu0 0.0
          %341 = vmatpush1.msra.mxu0 0.0
          %342 = vmatprep.subr.mxu0 0.0
          %343 = vmatpush1.msra.mxu0 0.0
          %344 = vmatprep.subr.mxu0 0.0
          %345 = vmatpush1.msra.mxu0 0.0
          %346 = vmatprep.subr.mxu0 0.0
          %347 = vmatpush1.msra.mxu0 0.0
          %348 = vmatprep.subr.mxu0 0.0
          %349 = vmatpush1.msra.mxu0 0.0
          %350 = vmatprep.subr.mxu0 0.0
          %351 = vmatpush1.msra.mxu0 0.0
          %352 = vmatprep.subr.mxu0 0.0
          %353 = vmatpush1.msra.mxu0 0.0
          %354 = vmatprep.mubr.f32.mxu0 0.0
          %355 = vmatmul.mubr.f32.gmra.mrb[0].mxu0 %v285
          %v356 = vpop.f32.mrb[0].mxu0
          %v357 = vadd.f32 0.0, %v356
          %v358 = vpop.f32.mrb[0].mxu0
          %359 = vmatprep.mubr.f32.mxu0 0.0
          %360 = vmatmul.mubr.f32.gmra.mrb[0].mxu0 %v288
          %v361 = vpop.f32.mrb[0].mxu0
          %v362 = vadd.f32 0.0, %v361
          %v363 = vpop.f32.mrb[0].mxu0
          %364 = vdwg.mxu0
          %vm365 = vcmask 261120
          %366 = vst.msk [vmem:[#allocation2] sm:$0xff] %vm365, %v357
          %367 = vst.msk [vmem:[#allocation2 + $0x8] sm:$0xff] %vm365, %v362
          %s368 = sld [smem:[#allocation3 + $0x4]]
          %v369 = vld [vmem:[%s239] sm:$0xff]
          %v370 = vld [vmem:[%s239 + $0x8] sm:$0xff]
          %v371 = vstv %s368
          %v372 = vmul.f32 %v371, %v369
          %v373 = vmul.f32 %v371, %v370
          %s374 = sld [smem:[#allocation3 + $0x5]]
          %v375 = vld [vmem:[%s239 + $0x10] sm:$0xff]
          %v376 = vld [vmem:[%s239 + $0x18] sm:$0xff]
          %v377 = vstv %s374
          %v378 = vmul.f32 %v377, %v375
          %v379 = vmul.f32 %v377, %v376
          %v380 = vadd.f32 %v372, %v378
          %v381 = vadd.f32 %v373, %v379
          %s382 = sld [smem:[#allocation3 + $0x6]]
          %v383 = vld [vmem:[%s239 + $0x20] sm:$0xff]
          %v384 = vld [vmem:[%s239 + $0x28] sm:$0xff]
          %v385 = vstv %s382
          %v386 = vmul.f32 %v385, %v383
          %v387 = vmul.f32 %v385, %v384
          %v388 = vadd.f32 %v380, %v386
          %v389 = vadd.f32 %v381, %v387
          %s390 = sld [smem:[#allocation3 + $0x7]]
          %v391 = vld [vmem:[%s239 + $0x30] sm:$0xff]
          %v392 = vld [vmem:[%s239 + $0x38] sm:$0xff]
          %v393 = vstv %s390
          %v394 = vmul.f32 %v393, %v391
          %v395 = vmul.f32 %v393, %v392
          %v396 = vadd.f32 %v388, %v394
          %v397 = vadd.f32 %v389, %v395
          %v398 = vld [vmem:[%s3] sm:$0xff]
          %v399 = vld [vmem:[%s3 + $0x8] sm:$0xff]
          %v401 = vsel %vm283, %v396, 0
          %v404 = vsel %vm283, %v397, 0
          %406 = vmatprep.subr.mxu0 0.0
          %407 = vmatpush1.msra.mxu0 %v398
          %408 = vmatprep.subr.mxu0 0.0
          %409 = vmatpush1.msra.mxu0 %v399
          %410 = vmatprep.subr.mxu0 0.0
          %411 = vmatpush1.msra.mxu0 0.0
          %412 = vmatprep.subr.mxu0 0.0
          %413 = vmatpush1.msra.mxu0 0.0
          %414 = vmatprep.subr.mxu0 0.0
          %415 = vmatpush1.msra.mxu0 0.0
          %416 = vmatprep.subr.mxu0 0.0
          %417 = vmatpush1.msra.mxu0 0.0
          %418 = vmatprep.subr.mxu0 0.0
          %419 = vmatpush1.msra.mxu0 0.0
          %420 = vmatprep.subr.mxu0 0.0
          %421 = vmatpush1.msra.mxu0 0.0
          %422 = vmatprep.subr.mxu0 0.0
          %423 = vmatpush1.msra.mxu0 0.0
          %424 = vmatprep.subr.mxu0 0.0
          %425 = vmatpush1.msra.mxu0 0.0
          %426 = vmatprep.subr.mxu0 0.0
          %427 = vmatpush1.msra.mxu0 0.0
          %428 = vmatprep.subr.mxu0 0.0
          %429 = vmatpush1.msra.mxu0 0.0
          %430 = vmatprep.subr.mxu0 0.0
          %431 = vmatpush1.msra.mxu0 0.0
          %432 = vmatprep.subr.mxu0 0.0
          %433 = vmatpush1.msra.mxu0 0.0
          %434 = vmatprep.subr.mxu0 0.0
          %435 = vmatpush1.msra.mxu0 0.0
          %436 = vmatprep.subr.mxu0 0.0
          %437 = vmatpush1.msra.mxu0 0.0
          %438 = vmatprep.subr.mxu0 0.0
          %439 = vmatpush1.msra.mxu0 0.0
          %440 = vmatprep.subr.mxu0 0.0
          %441 = vmatpush1.msra.mxu0 0.0
          %442 = vmatprep.subr.mxu0 0.0
          %443 = vmatpush1.msra.mxu0 0.0
          %444 = vmatprep.subr.mxu0 0.0
          %445 = vmatpush1.msra.mxu0 0.0
          %446 = vmatprep.subr.mxu0 0.0
          %447 = vmatpush1.msra.mxu0 0.0
          %448 = vmatprep.subr.mxu0 0.0
          %449 = vmatpush1.msra.mxu0 0.0
          %450 = vmatprep.subr.mxu0 0.0
          %451 = vmatpush1.msra.mxu0 0.0
          %452 = vmatprep.subr.mxu0 0.0
          %453 = vmatpush1.msra.mxu0 0.0
          %454 = vmatprep.subr.mxu0 0.0
          %455 = vmatpush1.msra.mxu0 0.0
          %456 = vmatprep.subr.mxu0 0.0
          %457 = vmatpush1.msra.mxu0 0.0
          %458 = vmatprep.subr.mxu0 0.0
          %459 = vmatpush1.msra.mxu0 0.0
          %460 = vmatprep.subr.mxu0 0.0
          %461 = vmatpush1.msra.mxu0 0.0
          %462 = vmatprep.subr.mxu0 0.0
          %463 = vmatpush1.msra.mxu0 0.0
          %464 = vmatprep.subr.mxu0 0.0
          %465 = vmatpush1.msra.mxu0 0.0
          %466 = vmatprep.subr.mxu0 0.0
          %467 = vmatpush1.msra.mxu0 0.0
          %468 = vmatprep.subr.mxu0 0.0
          %469 = vmatpush1.msra.mxu0 0.0
          %470 = vmatprep.mubr.f32.mxu0 0.0
          %471 = vmatmul.mubr.f32.gmra.mrb[0].mxu0 %v401
          %v472 = vpop.f32.mrb[0].mxu0
          %v473 = vadd.f32 0.0, %v472
          %v474 = vpop.f32.mrb[0].mxu0
          %475 = vmatprep.mubr.f32.mxu0 0.0
          %476 = vmatmul.mubr.f32.gmra.mrb[0].mxu0 %v404
          %v477 = vpop.f32.mrb[0].mxu0
          %v478 = vadd.f32 0.0, %v477
          %v479 = vpop.f32.mrb[0].mxu0
          %480 = vdwg.mxu0
          %483 = vrot.lane.b32.xlu0 %v473, 32
          %v484 = vpop.permute.xlu0 %483
          %485 = vrot.lane.b32.xlu0 %v478, 32
          %v486 = vpop.permute.xlu0 %485
          %vm489 = vcmask 523520
          %490 = vst.msk [vmem:[#allocation2] sm:$0xff] %vm489, %v484
          %491 = vst.msk [vmem:[#allocation2 + $0x8] sm:$0xff] %vm489, %v486
          %s492 = sld [smem:[#allocation3 + $0x8]]
          %v493 = vld [vmem:[%s239] sm:$0xff]
          %v494 = vld [vmem:[%s239 + $0x8] sm:$0xff]
          %v495 = vstv %s492
          %v496 = vmul.f32 %v495, %v493
          %v497 = vmul.f32 %v495, %v494
          %s498 = sld [smem:[#allocation3 + $0x9]]
          %v499 = vld [vmem:[%s239 + $0x10] sm:$0xff]
          %v500 = vld [vmem:[%s239 + $0x18] sm:$0xff]
          %v501 = vstv %s498
          %v502 = vmul.f32 %v501, %v499
          %v503 = vmul.f32 %v501, %v500
          %v504 = vadd.f32 %v496, %v502
          %v505 = vadd.f32 %v497, %v503
          %s506 = sld [smem:[#allocation3 + $0xa]]
          %v507 = vld [vmem:[%s239 + $0x20] sm:$0xff]
          %v508 = vld [vmem:[%s239 + $0x28] sm:$0xff]
          %v509 = vstv %s506
          %v510 = vmul.f32 %v509, %v507
          %v511 = vmul.f32 %v509, %v508
          %v512 = vadd.f32 %v504, %v510
          %v513 = vadd.f32 %v505, %v511
          %s514 = sld [smem:[#allocation3 + $0xb]]
          %v515 = vld [vmem:[%s239 + $0x30] sm:$0xff]
          %v516 = vld [vmem:[%s239 + $0x38] sm:$0xff]
          %v517 = vstv %s514
          %v518 = vmul.f32 %v517, %v515
          %v519 = vmul.f32 %v517, %v516
          %v520 = vadd.f32 %v512, %v518
          %v521 = vadd.f32 %v513, %v519
          %v522 = vld [vmem:[%s3] sm:$0xff]
          %v523 = vld [vmem:[%s3 + $0x8] sm:$0xff]
          %v525 = vsel %vm283, %v520, 0
          %v528 = vsel %vm283, %v521, 0
          %530 = vmatprep.subr.mxu0 0.0
          %531 = vmatpush1.msra.mxu0 %v522
          %532 = vmatprep.subr.mxu0 0.0
          %533 = vmatpush1.msra.mxu0 %v523
          %534 = vmatprep.subr.mxu0 0.0
          %535 = vmatpush1.msra.mxu0 0.0
          %536 = vmatprep.subr.mxu0 0.0
          %537 = vmatpush1.msra.mxu0 0.0
          %538 = vmatprep.subr.mxu0 0.0
          %539 = vmatpush1.msra.mxu0 0.0
          %540 = vmatprep.subr.mxu0 0.0
          %541 = vmatpush1.msra.mxu0 0.0
          %542 = vmatprep.subr.mxu0 0.0
          %543 = vmatpush1.msra.mxu0 0.0
          %544 = vmatprep.subr.mxu0 0.0
          %545 = vmatpush1.msra.mxu0 0.0
          %546 = vmatprep.subr.mxu0 0.0
          %547 = vmatpush1.msra.mxu0 0.0
          %548 = vmatprep.subr.mxu0 0.0
          %549 = vmatpush1.msra.mxu0 0.0
          %550 = vmatprep.subr.mxu0 0.0
          %551 = vmatpush1.msra.mxu0 0.0
          %552 = vmatprep.subr.mxu0 0.0
          %553 = vmatpush1.msra.mxu0 0.0
          %554 = vmatprep.subr.mxu0 0.0
          %555 = vmatpush1.msra.mxu0 0.0
          %556 = vmatprep.subr.mxu0 0.0
          %557 = vmatpush1.msra.mxu0 0.0
          %558 = vmatprep.subr.mxu0 0.0
          %559 = vmatpush1.msra.mxu0 0.0
          %560 = vmatprep.subr.mxu0 0.0
          %561 = vmatpush1.msra.mxu0 0.0
          %562 = vmatprep.subr.mxu0 0.0
          %563 = vmatpush1.msra.mxu0 0.0
          %564 = vmatprep.subr.mxu0 0.0
          %565 = vmatpush1.msra.mxu0 0.0
          %566 = vmatprep.subr.mxu0 0.0
          %567 = vmatpush1.msra.mxu0 0.0
          %568 = vmatprep.subr.mxu0 0.0
          %569 = vmatpush1.msra.mxu0 0.0
          %570 = vmatprep.subr.mxu0 0.0
          %571 = vmatpush1.msra.mxu0 0.0
          %572 = vmatprep.subr.mxu0 0.0
          %573 = vmatpush1.msra.mxu0 0.0
          %574 = vmatprep.subr.mxu0 0.0
          %575 = vmatpush1.msra.mxu0 0.0
          %576 = vmatprep.subr.mxu0 0.0
          %577 = vmatpush1.msra.mxu0 0.0
          %578 = vmatprep.subr.mxu0 0.0
          %579 = vmatpush1.msra.mxu0 0.0
          %580 = vmatprep.subr.mxu0 0.0
          %581 = vmatpush1.msra.mxu0 0.0
          %582 = vmatprep.subr.mxu0 0.0
          %583 = vmatpush1.msra.mxu0 0.0
          %584 = vmatprep.subr.mxu0 0.0
          %585 = vmatpush1.msra.mxu0 0.0
          %586 = vmatprep.subr.mxu0 0.0
          %587 = vmatpush1.msra.mxu0 0.0
          %588 = vmatprep.subr.mxu0 0.0
          %589 = vmatpush1.msra.mxu0 0.0
          %590 = vmatprep.subr.mxu0 0.0
          %591 = vmatpush1.msra.mxu0 0.0
          %592 = vmatprep.subr.mxu0 0.0
          %593 = vmatpush1.msra.mxu0 0.0
          %594 = vmatprep.mubr.f32.mxu0 0.0
          %595 = vmatmul.mubr.f32.gmra.mrb[0].mxu0 %v525
          %v596 = vpop.f32.mrb[0].mxu0
          %v597 = vadd.f32 0.0, %v596
          %v598 = vpop.f32.mrb[0].mxu0
          %599 = vmatprep.mubr.f32.mxu0 0.0
          %600 = vmatmul.mubr.f32.gmra.mrb[0].mxu0 %v528
          %v601 = vpop.f32.mrb[0].mxu0
          %v602 = vadd.f32 0.0, %v601
          %v603 = vpop.f32.mrb[0].mxu0
          %604 = vdwg.mxu0
          %607 = vrot.lane.b32.xlu0 %v597, 64
          %v608 = vpop.permute.xlu0 %607
          %609 = vrot.lane.b32.xlu0 %v602, 64
          %v610 = vpop.permute.xlu0 %609
          %vm613 = vcmask 785920
          %614 = vst.msk [vmem:[#allocation2] sm:$0xff] %vm613, %v608
          %615 = vst.msk [vmem:[#allocation2 + $0x8] sm:$0xff] %vm613, %v610
          %s616 = sld [smem:[#allocation3 + $0xc]]
          %v617 = vld [vmem:[%s239] sm:$0xff]
          %v618 = vld [vmem:[%s239 + $0x8] sm:$0xff]
          %v619 = vstv %s616
          %v620 = vmul.f32 %v619, %v617
          %v621 = vmul.f32 %v619, %v618
          %s622 = sld [smem:[#allocation3 + $0xd]]
          %v623 = vld [vmem:[%s239 + $0x10] sm:$0xff]
          %v624 = vld [vmem:[%s239 + $0x18] sm:$0xff]
          %v625 = vstv %s622
          %v626 = vmul.f32 %v625, %v623
          %v627 = vmul.f32 %v625, %v624
          %v628 = vadd.f32 %v620, %v626
          %v629 = vadd.f32 %v621, %v627
          %s630 = sld [smem:[#allocation3 + $0xe]]
          %v631 = vld [vmem:[%s239 + $0x20] sm:$0xff]
          %v632 = vld [vmem:[%s239 + $0x28] sm:$0xff]
          %v633 = vstv %s630
          %v634 = vmul.f32 %v633, %v631
          %v635 = vmul.f32 %v633, %v632
          %v636 = vadd.f32 %v628, %v634
          %v637 = vadd.f32 %v629, %v635
          %s638 = sld [smem:[#allocation3 + $0xf]]
          %v639 = vld [vmem:[%s239 + $0x30] sm:$0xff]
          %v640 = vld [vmem:[%s239 + $0x38] sm:$0xff]
          %v641 = vstv %s638
          %v642 = vmul.f32 %v641, %v639
          %v643 = vmul.f32 %v641, %v640
          %v644 = vadd.f32 %v636, %v642
          %v645 = vadd.f32 %v637, %v643
          %v646 = vld [vmem:[%s3] sm:$0xff]
          %v647 = vld [vmem:[%s3 + $0x8] sm:$0xff]
          %v649 = vsel %vm283, %v644, 0
          %v652 = vsel %vm283, %v645, 0
          %654 = vmatprep.subr.mxu0 0.0
          %655 = vmatpush1.msra.mxu0 %v646
          %656 = vmatprep.subr.mxu0 0.0
          %657 = vmatpush1.msra.mxu0 %v647
          %658 = vmatprep.subr.mxu0 0.0
          %659 = vmatpush1.msra.mxu0 0.0
          %660 = vmatprep.subr.mxu0 0.0
          %661 = vmatpush1.msra.mxu0 0.0
          %662 = vmatprep.subr.mxu0 0.0
          %663 = vmatpush1.msra.mxu0 0.0
          %664 = vmatprep.subr.mxu0 0.0
          %665 = vmatpush1.msra.mxu0 0.0
          %666 = vmatprep.subr.mxu0 0.0
          %667 = vmatpush1.msra.mxu0 0.0
          %668 = vmatprep.subr.mxu0 0.0
          %669 = vmatpush1.msra.mxu0 0.0
          %670 = vmatprep.subr.mxu0 0.0
          %671 = vmatpush1.msra.mxu0 0.0
          %672 = vmatprep.subr.mxu0 0.0
          %673 = vmatpush1.msra.mxu0 0.0
          %674 = vmatprep.subr.mxu0 0.0
          %675 = vmatpush1.msra.mxu0 0.0
          %676 = vmatprep.subr.mxu0 0.0
          %677 = vmatpush1.msra.mxu0 0.0
          %678 = vmatprep.subr.mxu0 0.0
          %679 = vmatpush1.msra.mxu0 0.0
          %680 = vmatprep.subr.mxu0 0.0
          %681 = vmatpush1.msra.mxu0 0.0
          %682 = vmatprep.subr.mxu0 0.0
          %683 = vmatpush1.msra.mxu0 0.0
          %684 = vmatprep.subr.mxu0 0.0
          %685 = vmatpush1.msra.mxu0 0.0
          %686 = vmatprep.subr.mxu0 0.0
          %687 = vmatpush1.msra.mxu0 0.0
          %688 = vmatprep.subr.mxu0 0.0
          %689 = vmatpush1.msra.mxu0 0.0
          %690 = vmatprep.subr.mxu0 0.0
          %691 = vmatpush1.msra.mxu0 0.0
          %692 = vmatprep.subr.mxu0 0.0
          %693 = vmatpush1.msra.mxu0 0.0
          %694 = vmatprep.subr.mxu0 0.0
          %695 = vmatpush1.msra.mxu0 0.0
          %696 = vmatprep.subr.mxu0 0.0
          %697 = vmatpush1.msra.mxu0 0.0
          %698 = vmatprep.subr.mxu0 0.0
          %699 = vmatpush1.msra.mxu0 0.0
          %700 = vmatprep.subr.mxu0 0.0
          %701 = vmatpush1.msra.mxu0 0.0
          %702 = vmatprep.subr.mxu0 0.0
          %703 = vmatpush1.msra.mxu0 0.0
          %704 = vmatprep.subr.mxu0 0.0
          %705 = vmatpush1.msra.mxu0 0.0
          %706 = vmatprep.subr.mxu0 0.0
          %707 = vmatpush1.msra.mxu0 0.0
          %708 = vmatprep.subr.mxu0 0.0
          %709 = vmatpush1.msra.mxu0 0.0
          %710 = vmatprep.subr.mxu0 0.0
          %711 = vmatpush1.msra.mxu0 0.0
          %712 = vmatprep.subr.mxu0 0.0
          %713 = vmatpush1.msra.mxu0 0.0
          %714 = vmatprep.subr.mxu0 0.0
          %715 = vmatpush1.msra.mxu0 0.0
          %716 = vmatprep.subr.mxu0 0.0
          %717 = vmatpush1.msra.mxu0 0.0
          %718 = vmatprep.mubr.f32.mxu0 0.0
          %719 = vmatmul.mubr.f32.gmra.mrb[0].mxu0 %v649
          %v720 = vpop.f32.mrb[0].mxu0
          %v721 = vadd.f32 0.0, %v720
          %v722 = vpop.f32.mrb[0].mxu0
          %723 = vmatprep.mubr.f32.mxu0 0.0
          %724 = vmatmul.mubr.f32.gmra.mrb[0].mxu0 %v652
          %v725 = vpop.f32.mrb[0].mxu0
          %v726 = vadd.f32 0.0, %v725
          %v727 = vpop.f32.mrb[0].mxu0
          %728 = vdwg.mxu0
          %731 = vrot.lane.b32.xlu0 %v721, 96
          %v732 = vpop.permute.xlu0 %731
          %733 = vrot.lane.b32.xlu0 %v726, 96
          %v734 = vpop.permute.xlu0 %733
          %vm737 = vcmask 1048320
          %738 = vst.msk [vmem:[#allocation2] sm:$0xff] %vm737, %v732
          %739 = vst.msk [vmem:[#allocation2 + $0x8] sm:$0xff] %vm737, %v734
        $region44: #{tpu_custom_call.1} parent=35 // pred_fallthru
          _
        %v740 = vld [vmem:[%s244] sm:$0xff]
        %v741 = vld [vmem:[%s244 + $0x8] sm:$0xff]
        %v742 = vld [vmem:[#allocation2] sm:$0xff]
        %v743 = vld [vmem:[#allocation2 + $0x8] sm:$0xff]
        %vm744 = vcmask 130048
        %v746 = vsel %vm744, %v740, 0
        %v749 = vsel %vm744, %v741, 0
        %751 = vmatprep.subr.mxu0 0.0
        %752 = vmatpush1.msra.mxu0 %v742
        %753 = vmatprep.subr.mxu0 0.0
        %754 = vmatpush1.msra.mxu0 %v743
        %755 = vmatprep.subr.mxu0 0.0
        %756 = vmatpush1.msra.mxu0 0.0
        %757 = vmatprep.subr.mxu0 0.0
        %758 = vmatpush1.msra.mxu0 0.0
        %759 = vmatprep.subr.mxu0 0.0
        %760 = vmatpush1.msra.mxu0 0.0
        %761 = vmatprep.subr.mxu0 0.0
        %762 = vmatpush1.msra.mxu0 0.0
        %763 = vmatprep.subr.mxu0 0.0
        %764 = vmatpush1.msra.mxu0 0.0
        %765 = vmatprep.subr.mxu0 0.0
        %766 = vmatpush1.msra.mxu0 0.0
        %767 = vmatprep.subr.mxu0 0.0
        %768 = vmatpush1.msra.mxu0 0.0
        %769 = vmatprep.subr.mxu0 0.0
        %770 = vmatpush1.msra.mxu0 0.0
        %771 = vmatprep.subr.mxu0 0.0
        %772 = vmatpush1.msra.mxu0 0.0
        %773 = vmatprep.subr.mxu0 0.0
        %774 = vmatpush1.msra.mxu0 0.0
        %775 = vmatprep.subr.mxu0 0.0
        %776 = vmatpush1.msra.mxu0 0.0
        %777 = vmatprep.subr.mxu0 0.0
        %778 = vmatpush1.msra.mxu0 0.0
        %779 = vmatprep.subr.mxu0 0.0
        %780 = vmatpush1.msra.mxu0 0.0
        %781 = vmatprep.subr.mxu0 0.0
        %782 = vmatpush1.msra.mxu0 0.0
        %783 = vmatprep.subr.mxu0 0.0
        %784 = vmatpush1.msra.mxu0 0.0
        %785 = vmatprep.subr.mxu0 0.0
        %786 = vmatpush1.msra.mxu0 0.0
        %787 = vmatprep.subr.mxu0 0.0
        %788 = vmatpush1.msra.mxu0 0.0
        %789 = vmatprep.subr.mxu0 0.0
        %790 = vmatpush1.msra.mxu0 0.0
        %791 = vmatprep.subr.mxu0 0.0
        %792 = vmatpush1.msra.mxu0 0.0
        %793 = vmatprep.subr.mxu0 0.0
        %794 = vmatpush1.msra.mxu0 0.0
        %795 = vmatprep.subr.mxu0 0.0
        %796 = vmatpush1.msra.mxu0 0.0
        %797 = vmatprep.subr.mxu0 0.0
        %798 = vmatpush1.msra.mxu0 0.0
        %799 = vmatprep.subr.mxu0 0.0
        %800 = vmatpush1.msra.mxu0 0.0
        %801 = vmatprep.subr.mxu0 0.0
        %802 = vmatpush1.msra.mxu0 0.0
        %803 = vmatprep.subr.mxu0 0.0
        %804 = vmatpush1.msra.mxu0 0.0
        %805 = vmatprep.subr.mxu0 0.0
        %806 = vmatpush1.msra.mxu0 0.0
        %807 = vmatprep.subr.mxu0 0.0
        %808 = vmatpush1.msra.mxu0 0.0
        %809 = vmatprep.subr.mxu0 0.0
        %810 = vmatpush1.msra.mxu0 0.0
        %811 = vmatprep.subr.mxu0 0.0
        %812 = vmatpush1.msra.mxu0 0.0
        %813 = vmatprep.subr.mxu0 0.0
        %814 = vmatpush1.msra.mxu0 0.0
        %815 = vmatprep.mubr.f32.mxu0 0.0
        %816 = vmatmul.mubr.f32.gmra.mrb[0].mxu0 %v746
        %v817 = vpop.f32.mrb[0].mxu0
        %v818 = vadd.f32 0.0, %v817
        %v819 = vpop.f32.mrb[0].mxu0
        %820 = vmatprep.mubr.f32.mxu0 0.0
        %821 = vmatmul.mubr.f32.gmra.mrb[0].mxu0 %v749
        %v822 = vpop.f32.mrb[0].mxu0
        %v823 = vadd.f32 0.0, %v822
        %v824 = vpop.f32.mrb[0].mxu0
        %825 = vdwg.mxu0
        %vm826 = vcmask 261120
        %827 = vst.msk [vmem:[%s234] sm:$0xff] %vm826, %v818
        %828 = vst.msk [vmem:[%s234 + $0x8] sm:$0xff] %vm826, %v823
        %831 = vrot.lane.b32.xlu0 %v818, 96
        %v832 = vpop.permute.xlu0 %831
        %833 = vrot.lane.b32.xlu0 %v823, 96
        %v834 = vpop.permute.xlu0 %833
        %s837 = scalar_lea.vmem %s234, 16 [#allocation6]
        %838 = vst.msk [vmem:[%s837] sm:$0xff] %vm826, %v832
        %839 = vst.msk [vmem:[%s837 + $0x8] sm:$0xff] %vm826, %v834
        %840 = vrot.lane.b32.xlu0 %v818, 64
        %v841 = vpop.permute.xlu0 %840
        %842 = vrot.lane.b32.xlu0 %v823, 64
        %v843 = vpop.permute.xlu0 %842
        %s846 = scalar_lea.vmem %s234, 32 [#allocation6]
        %847 = vst.msk [vmem:[%s846] sm:$0xff] %vm826, %v841
        %848 = vst.msk [vmem:[%s846 + $0x8] sm:$0xff] %vm826, %v843
        %849 = vrot.lane.b32.xlu0 %v818, 32
        %v850 = vpop.permute.xlu0 %849
        %851 = vrot.lane.b32.xlu0 %v823, 32
        %v852 = vpop.permute.xlu0 %851
        %s855 = scalar_lea.vmem %s234, 48 [#allocation6]
        %856 = vst.msk [vmem:[%s855] sm:$0xff] %vm826, %v850
        %857 = vst.msk [vmem:[%s855 + $0x8] sm:$0xff] %vm826, %v852
        %s858 = sand.u32 %s135, 1
        %s859 = scalar_lea.sflag [#allocation4], %s858
        %s860 = sand.u32 %s135, 1
        %s861 = smul.addr %s860, 64
        %s862 = scalar_lea.vmem [#allocation6], %s861
        // Predicated region
        $region45: #{tpu_custom_call.1} parent=35 // pred_check
          %p863 = pneg %p145
        $region46: #{tpu_custom_call.1} parent=35 // pred_check_branch
          %865 = sbr.rel (%p863) target = $region48
        $region47: #{tpu_custom_call.1} parent=35 // pred_region
          #allocation8 [shape = 'u32[6]{0}', space=smem, size = 0x18, scoped, tag = 'DMA stride descriptor']
          %s866 = smul.u32 2, %s24
          %s868 = ssub.s32 1024, 1024
          %869 = vsyncadd %s859, %s868
          %s870 = smul.addr %s23, 16
          %s871 = sadd.s32 %s866, %s870
          %s872 = smul.addr %s871, 128
          %s873 = scalar_lea.hbm %s4, %s872
          %s875 = sshll.u32 1, 14
          %s876 = sxor.u32 4294967295, %s875
          %s879 = sshll.u32 7, 18
          %s880 = sxor.u32 4294967295, %s879
          %s881 = sand.u32 0, %s880
          %s883 = sor.u32 %s881, 0
          %s885 = sshll.u32 3, 24
          %s886 = sxor.u32 4294967295, %s885
          %s887 = sand.u32 %s883, %s886
          %s889 = sor.u32 %s887, 0
          %s890 = sshll.u32 %s862, 4
          %s891 = int_to_ptr.vmem [resolvable:$true] %s890
          %897 = sst [smem:[#allocation8]] 256
          %s898 = scalar_lea.smem [#allocation8], 1
          %899 = sst [smem:[%s898]] 512
          %s900 = scalar_lea.smem [#allocation8], 2
          %901 = sst [smem:[%s900]] 2
          %s902 = scalar_lea.smem [#allocation8], 3
          %903 = sst [smem:[%s902]] 128
          %s904 = scalar_lea.smem [#allocation8], 4
          %905 = sst [smem:[%s904]] 128
          %s906 = scalar_lea.smem [#allocation8], 5
          %907 = sst [smem:[%s906]] 8
          %909 = dma.general %s891, 1024, %s873, %s859, [#allocation7], [#allocation8], %s889, 0
        $region48: #{tpu_custom_call.1} parent=35 // pred_fallthru
          _
      $region36: #{tpu_custom_call.1} parent=5 // pred_fallthru
        _
      %p910 = scmp.le.s32.totalorder 2, %s14
      // Predicated region
      $region49: #{tpu_custom_call.1} parent=5 // pred_check
        %p911 = pneg %p910
      $region50: #{tpu_custom_call.1} parent=5 // pred_check_branch
        %913 = sbr.rel (%p911) target = $region52
      $region51: #{tpu_custom_call.1} parent=5 // pred_region
        %s914 = ssub.s32 %s14, 2
        // Predicated region
        $region53: #{tpu_custom_call.1} parent=51 // pred_check
          %p915 = pneg %p151
        $region54: #{tpu_custom_call.1} parent=51 // pred_check_branch
          %917 = sbr.rel (%p915) target = $region56
        $region55: #{tpu_custom_call.1} parent=51 // pred_region
          %s918 = sand.u32 %s136, 1
          %s919 = scalar_lea.sflag [#allocation4], %s918
          %s920 = sand.u32 %s136, 1
          %s921 = smul.addr %s920, 64
          %s922 = scalar_lea.vmem [#allocation6], %s921
          %923 = dma.done %s919, 1024
        $region56: #{tpu_custom_call.1} parent=51 // pred_fallthru
          _
      $region52: #{tpu_custom_call.1} parent=5 // pred_fallthru
        _
    $region6: #{tpu_custom_call.1} parent=1 // loop_footer
      %s18 = sadd.s32 1, %s14
    $region7: #{tpu_custom_call.1} parent=1 // loop_footer_branch
      %13 = sbr.rel target = $region3
    $region8: #{tpu_custom_call.1} parent=1 // loop_exit
      _
    %924 = vsyncpa [#allocation4], 1
    %s925 = scalar_lea.sflag [#allocation4], 1
    %926 = vsyncpa %s925, 1
    %927 = vsyncpa [#allocation5], 1
    %s928 = scalar_lea.sflag [#allocation5], 1
    %929 = vsyncpa %s928, 1

</llo_original>
